<compile_context>
chip_gen: v7x
topology: tpu7x:2x2x1
jax: 0.10.0
libtpu: 0.0.40
codegen_flags: <defaults>
</compile_context>

<pallas_src>
import functools

import jax
import jax.numpy as jnp
from jax.experimental import pallas as pl
from jax.experimental.pallas import tpu as pltpu


def _trend_pool_kernel(x_ref, o_ref, *, kernel_size: int, lp: int, length: int):
    pad = kernel_size // 2
    x = x_ref[...]                                   # (TR, Lp)
    ax = jnp.abs(x).astype(jnp.float32)

    # Guard band: lanes in [length, Lp) may hold garbage (partial edge block,
    # no wrapper padding).  Zeroing them is exactly the zero padding the avg
    # pool needs, and -- since |x| >= 0 -- is equivalent to -inf padding for
    # the max pool.  One mask, two selects, reused by both stages.
    lane = jax.lax.broadcasted_iota(jnp.int32, ax.shape, 1)
    valid = lane < length
    zero = jnp.float32(0.0)
    ax = jnp.where(valid, ax, zero)

    def shifted(v, s):
        # shifted(v, s)[i] = v[(i + s) % Lp]
        return pltpu.roll(v, shift=(-s) % lp, axis=1)

    # --- max_pool1d(|x|, k, stride=1, pad=k//2) ---
    if kernel_size == 5:
        # Window-reuse tree: 3 rolls + 3 maxes (vs 4 + 4 independent taps).
        t1 = jnp.maximum(ax, shifted(ax, 1))                         # [i, i+1]
        m = jnp.maximum(jnp.maximum(shifted(t1, -2), t1), shifted(ax, 2))
    else:
        m = ax
        for s in range(-pad, pad + 1):
            if s == 0:
                continue
            m = jnp.maximum(m, shifted(ax, s))

    # Re-zero the guard lanes (windows near the right edge leak real data into
    # [length, length+pad)); required for correct zero padding of the avg pool.
    m = jnp.where(valid, m, zero)

    # --- avg_pool1d(m, k, stride=1, pad=k//2), zero pad, divide by k ---
    if kernel_size == 5:
        s1 = m + shifted(m, 1)                                       # [i, i+1]
        acc = shifted(s1, -2) + s1 + shifted(m, 2)
    else:
        acc = m
        for s in range(-pad, pad + 1):
            if s == 0:
                continue
            acc = acc + shifted(m, s)

    o_ref[...] = (acc * jnp.float32(1.0 / kernel_size)).astype(o_ref.dtype)


def trend_pool(x: jax.Array, kernel_size: int = 5) -> jax.Array:
    """x: (B, C, L) float array -> (B, C, L)."""
    if kernel_size <= 1:
        return x
    # TODO(synk): even kernel_size changes the output length (L+2 after two
    # pools); only odd kernel sizes (default 5) are supported here.
    assert kernel_size % 2 == 1, "only odd kernel_size supported"

    B, C, L = x.shape
    R = B * C
    pad = kernel_size // 2
    x2 = x.reshape(R, L)                      # metadata-only reshape, no copy

    # Lane-dense block width: multiple of 128 with a guard band >= pad so the
    # circular rolls wrap into guard lanes, never into real data.
    LANE = 128
    Lp = ((L + LANE - 1) // LANE) * LANE
    if Lp - L < pad:
        Lp += LANE
    assert Lp - L >= pad

    # Row tile: each f32 (TR, Lp) intermediate capped at ~1 MiB.  With
    # double-buffered in/out blocks plus a handful of live temporaries the
    # working set stays ~10-12 MiB -- comfortable on v5e/v6e/v7x scoped VMEM.
    elems_cap = (1 << 20) // 4
    tr_cap = max(8, (elems_cap // Lp) // 8 * 8)
    r8 = ((R + 7) // 8) * 8
    TR = min(tr_cap, r8)
    grid_r = pl.cdiv(R, TR)
    # Megacore-friendly split: prefer an even number of row blocks (>= 2) so
    # the "parallel" axis divides evenly across v7x's 2 TensorCores (no effect
    # on single-TC v5e/v6e beyond negligible per-step overhead).
    if grid_r % 2 == 1 and r8 >= 16:
        TR = max(8, (pl.cdiv(R, grid_r + 1) + 7) // 8 * 8)
        grid_r = pl.cdiv(R, TR)

    kernel = functools.partial(
        _trend_pool_kernel, kernel_size=kernel_size, lp=Lp, length=L
    )

    dtype_bytes = jnp.dtype(x.dtype).itemsize
    ops_per_elem = (6 if kernel_size == 5 else 2 * (kernel_size - 1)) + 4
    cost = pl.CostEstimate(
        flops=ops_per_elem * R * L,
        transcendentals=0,
        bytes_accessed=2 * R * L * dtype_bytes,
    )

    out = pl.pallas_call(
        kernel,
        out_shape=jax.ShapeDtypeStruct((R, L), x.dtype),
        grid_spec=pltpu.PrefetchScalarGridSpec(
            num_scalar_prefetch=0,
            grid=(grid_r,),
            in_specs=[pl.BlockSpec((TR, Lp), lambda i: (i, 0))],
            out_specs=pl.BlockSpec((TR, Lp), lambda i: (i, 0)),
        ),
        compiler_params=pltpu.CompilerParams(
            dimension_semantics=("parallel",),
            vmem_limit_bytes=32 * 1024 * 1024,
        ),
        cost_estimate=cost,
    )(x2)

    return out.reshape(B, C, L)


def _ref_trend_pool(x: jax.Array, k: int) -> jax.Array:
    # Pure-JAX reference mirroring torch.nn.functional semantics.
    if k <= 1:
        return x
    pad = k // 2
    L = x.shape[-1]
    ax = jnp.abs(x)
    xp = jnp.pad(ax, ((0, 0), (0, 0), (pad, pad)), constant_values=-jnp.inf)
    m = jnp.max(jnp.stack([xp[..., d:d + L] for d in range(k)], axis=-1), axis=-1)
    mp = jnp.pad(m, ((0, 0), (0, 0), (pad, pad)))
    a = jnp.sum(jnp.stack([mp[..., d:d + L] for d in range(k)], axis=-1), axis=-1) / k
    return a.astype(x.dtype)


if __name__ == "__main__":
    key = jax.random.PRNGKey(0)

    # Small shape matching the module's NCW input.
    B, C, L = 2, 4, 16
    x = jax.random.normal(key, (B, C, L), dtype=jnp.float32)
    out = jax.block_until_ready(trend_pool(x, kernel_size=5))
    ref = _ref_trend_pool(x, 5)
    assert out.shape == (B, C, L)
    assert jnp.allclose(out, ref, atol=1e-5, rtol=1e-5), "mismatch vs reference"

    # Ragged L (not a multiple of 128) + partial row block (R=15, TR=8).
    k2 = jax.random.PRNGKey(1)
    B2, C2, L2 = 3, 5, 200
    x2 = jax.random.normal(k2, (B2, C2, L2), dtype=jnp.float32)
    out2 = jax.block_until_ready(trend_pool(x2, kernel_size=5))
    ref2 = _ref_trend_pool(x2, 5)
    assert out2.shape == (B2, C2, L2)
    assert jnp.allclose(out2, ref2, atol=1e-5, rtol=1e-5), "mismatch (ragged L)"

    # L exactly a multiple of 128: exercises the extra guard lane group
    # (circular rolls must not wrap real data back around).
    k3 = jax.random.PRNGKey(2)
    B3, C3, L3 = 1, 2, 128
    x3 = jax.random.normal(k3, (B3, C3, L3), dtype=jnp.float32)
    out3 = jax.block_until_ready(trend_pool(x3, kernel_size=5))
    ref3 = _ref_trend_pool(x3, 5)
    assert out3.shape == (B3, C3, L3)
    assert jnp.allclose(out3, ref3, atol=1e-5, rtol=1e-5), "mismatch (L=128)"

    print("KERNEL_OK")
</pallas_src>

<mosaic_0001>
module attributes {stable_mosaic.version = 11 : i64} {
  func.func @_trend_pool_kernel(%arg0: i32, %arg1: memref<8x128xf32, #tpu.memory_space<vmem>>, %arg2: memref<8x128xf32, #tpu.memory_space<vmem>>) attributes {dimension_semantics = [#tpu.dimension_semantics<parallel>], iteration_bounds = array<i64: 1>, scalar_prefetch = 0 : i64, scratch_operands = 0 : i64, tpu.core_type = #tpu.core_type<tc>, window_params = [{transform_indices = @transform_0, window_bounds = array<i64: 8, 128>}, {transform_indices = @transform_1, window_bounds = array<i64: 8, 128>}]} {
    %c0 = arith.constant 0 : index
    %c0_0 = arith.constant 0 : index
    %0 = vector.load %arg1[%c0, %c0_0] : memref<8x128xf32, #tpu.memory_space<vmem>>, vector<8x128xf32>
    %1 = math.absf %0 : vector<8x128xf32>
    %2 = tpu.iota {dimensions = array<i32: 1>} : vector<8x128xi32>
    %c16_i32 = arith.constant 16 : i32
    %3 = vector.broadcast %c16_i32 : i32 to vector<8x128xi32>
    %4 = arith.cmpi slt, %2, %3 : vector<8x128xi32>
    %cst = arith.constant 0.000000e+00 : f32
    %5 = vector.broadcast %cst : f32 to vector<8x128xf32>
    %6 = arith.select %4, %1, %5 : vector<8x128xi1>, vector<8x128xf32>
    %c127_i32 = arith.constant 127 : i32
    %7 = tpu.dynamic_rotate %6 by %c127_i32 dim 1 : vector<8x128xf32>, i32 -> vector<8x128xf32>
    %8 = arith.maximumf %6, %7 : vector<8x128xf32>
    %c2_i32 = arith.constant 2 : i32
    %9 = tpu.dynamic_rotate %8 by %c2_i32 dim 1 : vector<8x128xf32>, i32 -> vector<8x128xf32>
    %10 = arith.maximumf %9, %8 : vector<8x128xf32>
    %c126_i32 = arith.constant 126 : i32
    %11 = tpu.dynamic_rotate %6 by %c126_i32 dim 1 : vector<8x128xf32>, i32 -> vector<8x128xf32>
    %12 = arith.maximumf %10, %11 : vector<8x128xf32>
    %cst_1 = arith.constant 0.000000e+00 : f32
    %13 = vector.broadcast %cst_1 : f32 to vector<8x128xf32>
    %14 = arith.select %4, %12, %13 : vector<8x128xi1>, vector<8x128xf32>
    %c127_i32_2 = arith.constant 127 : i32
    %15 = tpu.dynamic_rotate %14 by %c127_i32_2 dim 1 : vector<8x128xf32>, i32 -> vector<8x128xf32>
    %16 = arith.addf %14, %15 : vector<8x128xf32>
    %c2_i32_3 = arith.constant 2 : i32
    %17 = tpu.dynamic_rotate %16 by %c2_i32_3 dim 1 : vector<8x128xf32>, i32 -> vector<8x128xf32>
    %18 = arith.addf %17, %16 : vector<8x128xf32>
    %c126_i32_4 = arith.constant 126 : i32
    %19 = tpu.dynamic_rotate %14 by %c126_i32_4 dim 1 : vector<8x128xf32>, i32 -> vector<8x128xf32>
    %20 = arith.addf %18, %19 : vector<8x128xf32>
    %cst_5 = arith.constant 2.000000e-01 : f32
    %21 = vector.broadcast %cst_5 : f32 to vector<8x128xf32>
    %22 = arith.mulf %20, %21 : vector<8x128xf32>
    %c0_6 = arith.constant 0 : index
    %c0_7 = arith.constant 0 : index
    %23 = vector.load %arg2[%c0_6, %c0_7] : memref<8x128xf32, #tpu.memory_space<vmem>>, vector<8x128xf32>
    tpu.vector_store %arg2[%c0_6, %c0_7], %22 {strides = array<i32>} : memref<8x128xf32, #tpu.memory_space<vmem>>, vector<8x128xf32>,
    return
  }
  func.func @transform_0(%arg0: i32) -> (i32, i32) {
    %c0_i32 = arith.constant 0 : i32
    %c0_i32_0 = arith.constant 0 : i32
    return %arg0, %c0_i32 : i32, i32
  }
  func.func @transform_1(%arg0: i32) -> (i32, i32) {
    %c0_i32 = arith.constant 0 : i32
    %c0_i32_0 = arith.constant 0 : i32
    return %arg0, %c0_i32 : i32, i32
  }
}

</mosaic_0001>

<llo_original>
// kernel: tpu_custom_call.1
$region0: #{tpu_custom_call.1}
  #allocation0 [shape = 'u32[]', space=smem, size = 0x4, offset = 0x4, fixed_abs, tag = 'smem constant byte address 0x4 - core index']
  #allocation1 [shape = 'u32[144,128]{1,0:T(1,128)}', space=vmem, size = 0x12000, scoped, tag = 'internal scratch']
  %s0 = inlined_call_operand.hbm [shape: f32[8,16], index: 0, kind: input, shape index: {}]
  %s1 = inlined_call_operand.hbm [shape: f32[8,16], index: 1, kind: output, shape index: {}]
  %s2 = sld [smem:[#allocation0]]
  $region18: #{tpu_custom_call.1} parent=0
    _
  %s4 = ssub.s32 1, %s2
  %s5 = scalar_select 0, %s4, %s2
  $region1: #{tpu_custom_call.1} parent=0
    #allocation2 [shape = 'u8[4096]{0}', space=vmem, size = 0x1000, scoped, tag = 'input window, operand 0, single buffered']
    #allocation3 [shape = 's32[1]{0}', space=sflag, size = 0x4, scoped, tag = 'scoped memory for tpu_custom_call.1']
    #allocation4 [shape = 's32[1]{0}', space=sflag, size = 0x4, scoped, tag = 'scoped memory for tpu_custom_call.1']
    #allocation5 [shape = 'u8[4096]{0}', space=vmem, size = 0x1000, scoped, tag = 'output window, operand 0, single buffered']
    %6 = vsyncpa [#allocation3], 0
    %7 = vsyncpa [#allocation4], 0
    // Predicated region
    $region2: #{tpu_custom_call.1} parent=1 // pred_check
      _
    $region3: #{tpu_custom_call.1} parent=1 // pred_check_branch
      %9 = sbr.rel (0) target = $region5
    $region4: #{tpu_custom_call.1} parent=1 // pred_region
      %s11 = ssub.s32 128, 128
      %12 = vsyncadd [#allocation3], %s11
      %s14 = sshll.u32 [#allocation2], 4
      %s15 = int_to_ptr.vmem [resolvable:$true] %s14
      %17 = dma.hbm_to_vmem [thread:$0]  %s0, 128, %s15, [#allocation3]
    $region5: #{tpu_custom_call.1} parent=1 // pred_fallthru
      _
    // Predicated region
    $region6: #{tpu_custom_call.1} parent=1 // pred_check
      _
    $region7: #{tpu_custom_call.1} parent=1 // pred_check_branch
      %19 = sbr.rel (0) target = $region9
    $region8: #{tpu_custom_call.1} parent=1 // pred_region
      %20 = dma.done [#allocation3], 128
    $region9: #{tpu_custom_call.1} parent=1 // pred_fallthru
      _
    %v21 = vld [vmem:[#allocation2] sm:$0xff]
    %v22 = vand.u32 2147483647, %v21
    %v23 = vlaneseq
    %v24 = vand.u32 %v23, 127
    %vm25 = vcmp.lt.s32.totalorder %v24, 16
    %v26 = vsel %vm25, %v22, 0.0
    %27 = vrot.lane.b32.xlu0 %v26, 127
    %v28 = vpop.permute.xlu0 %27
    %v29 = vmax.f32 %v26, %v28
    %30 = vrot.lane.b32.xlu0 %v29, 2
    %v31 = vpop.permute.xlu0 %30
    %v32 = vmax.f32 %v31, %v29
    %33 = vrot.lane.b32.xlu0 %v26, 126
    %v34 = vpop.permute.xlu0 %33
    %v35 = vmax.f32 %v32, %v34
    %v36 = vsel %vm25, %v35, 0.0
    %37 = vrot.lane.b32.xlu0 %v36, 127
    %v38 = vpop.permute.xlu0 %37
    %v39 = vadd.f32 %v36, %v38
    %40 = vrot.lane.b32.xlu0 %v39, 2
    %v41 = vpop.permute.xlu0 %40
    %v42 = vadd.f32 %v41, %v39
    %43 = vrot.lane.b32.xlu0 %v36, 126
    %v44 = vpop.permute.xlu0 %43
    %v45 = vadd.f32 %v42, %v44
    %v46 = vmul.f32 %v45, 0.2
    %47 = vst [vmem:[#allocation5] sm:$0xff] %v46
    // Predicated region
    $region10: #{tpu_custom_call.1} parent=1 // pred_check
      _
    $region11: #{tpu_custom_call.1} parent=1 // pred_check_branch
      %49 = sbr.rel (0) target = $region13
    $region12: #{tpu_custom_call.1} parent=1 // pred_region
      %s51 = ssub.s32 128, 128
      %52 = vsyncadd [#allocation4], %s51
      %s54 = sshll.u32 [#allocation5], 4
      %s55 = int_to_ptr.vmem [resolvable:$true] %s54
      %57 = dma.vmem_to_hbm [thread:$0]  %s55, 128, %s1, [#allocation4]
    $region13: #{tpu_custom_call.1} parent=1 // pred_fallthru
      _
    // Predicated region
    $region14: #{tpu_custom_call.1} parent=1 // pred_check
      _
    $region15: #{tpu_custom_call.1} parent=1 // pred_check_branch
      %59 = sbr.rel (0) target = $region17
    $region16: #{tpu_custom_call.1} parent=1 // pred_region
      %60 = dma.done [#allocation4], 128
    $region17: #{tpu_custom_call.1} parent=1 // pred_fallthru
      _
    %61 = vsyncpa [#allocation3], 1
    %62 = vsyncpa [#allocation4], 1

</llo_original>
